<compile_context>
chip_gen: v5e
topology: v5e:2x2
jax: 0.10.0
libtpu: 0.0.40
codegen_flags: <defaults>
</compile_context>

<pallas_src>
import functools
import math

import jax
import jax.numpy as jnp
from jax.experimental import pallas as pl
from jax.experimental.pallas import tpu as pltpu


_LANE = 128
_MAX_TILE_ROWS = 2048   # time-tile cap: keeps double-buffered VMEM well under 16 MiB


def _round_up(x, m):
    return -(-x // m) * m


# -----------------------------------------------------------------------------
# Pallas kernel: fused causal depthwise conv + chunk-masked depthwise conv *
# position-in-chunk scale, on one (T, C_blk) flat tile.
# -----------------------------------------------------------------------------
def _ccdc_kernel(x_ref, p_ref, s_ref, m_ref, o_ref, *, half, ksize):
    # x_ref: (1, 1, T + 2*pad, C_blk)  input tile with 2*pad-row halo
    # p_ref: (half + ksize + 2, C_blk) stacked params:
    #        rows [0:half)=causal taps, [half:half+K)=chunk taps, then bc, bk
    # s_ref: (T, C_blk)  per-row chunk scale (already phase-aligned to the tile)
    # m_ref: (T, ksize)  per-row per-tap chunk-boundary mask (float 0/1)
    # o_ref: (1, T, C_blk)
    t_rows = o_ref.shape[1]
    x = x_ref[0, 0]                                   # (T + 2*pad, C_blk)

    # ---- causal depthwise conv (half taps, window [t-pad, t]) ----
    acc = p_ref[0:1, :] * x[0:t_rows, :]
    for j in range(1, half):
        acc = acc + p_ref[j:j + 1, :] * x[j:j + t_rows, :]

    # ---- chunkwise depthwise conv ("same" within chunk via mask) ----
    cacc = p_ref[half:half + 1, :] * (m_ref[:, 0:1] * x[0:t_rows, :])
    for j in range(1, ksize):
        cacc = cacc + p_ref[half + j:half + j + 1, :] * (
            m_ref[:, j:j + 1] * x[j:j + t_rows, :])

    bc = p_ref[half + ksize:half + ksize + 1, :]
    bk = p_ref[half + ksize + 1:half + ksize + 2, :]
    o_ref[0] = ((acc + bc) + (cacc + bk) * s_ref[...]).astype(o_ref.dtype)


# -----------------------------------------------------------------------------
# Glue: chunk scale (same math as the torch module) and the wrapper.
# -----------------------------------------------------------------------------
def _get_chunk_scale(scale_param, chunk_size, kernel_size):
    """scale_param: (2, C, K) -> (C, chunk_size) scale, matching the torch code."""
    left_edge = scale_param[0]
    right_edge = scale_param[1]
    if chunk_size < kernel_size:
        left_edge = left_edge[:, :chunk_size]
        right_edge = right_edge[:, kernel_size - chunk_size:]
    else:
        t = chunk_size - kernel_size
        padz = jnp.zeros((scale_param.shape[1], t), scale_param.dtype)
        left_edge = jnp.concatenate([left_edge, padz], axis=-1)
        right_edge = jnp.concatenate([padz, right_edge], axis=-1)
    return 1.0 + (left_edge + right_edge)             # (C, chunk_size)


def chunk_causal_depthwise_conv1d(x, params, chunk_size=-1):
    """x: (batch, channels, seq_len) float32 — same layout as the torch module."""
    f32 = jnp.float32
    w_causal = params["w_causal"]            # (C, half)
    b_causal = params["b_causal"]            # (C,)
    w_chunk = params["w_chunk"]              # (C, K)
    b_chunk = params["b_chunk"]              # (C,)
    scale_p = params["chunkwise_conv_scale"]  # (2, C, K)

    ksize = int(w_chunk.shape[1])
    half = (ksize + 1) // 2
    pad = ksize // 2

    batch, channels, seq_len = x.shape
    if chunk_size < 0 or chunk_size > seq_len:
        chunk_size = seq_len
    chunk = int(chunk_size)
    s_pad = _round_up(seq_len, chunk)

    # ---- choose the time tile T (multiple of 8; preferably a multiple of chunk) ----
    period = (chunk * 8) // math.gcd(chunk, 8)        # lcm(chunk, 8)
    if period <= _MAX_TILE_ROWS:
        t_rows = period * max(1, _MAX_TILE_ROWS // period)
        t_rows = min(t_rows, _round_up(s_pad, period))
        t_rows = max(t_rows, _round_up(max(2 * pad, 8), period))
    else:
        # degenerate chunk sizes: tile on 8 rows, stream full per-row scale/mask
        t_rows = min(_MAX_TILE_ROWS, _round_up(s_pad, 8))
        t_rows = max(t_rows, _round_up(max(2 * pad, 8), 8))
    s_work = _round_up(s_pad, t_rows)
    n_ti = s_work // t_rows

    c_pad = _round_up(channels, _LANE)
    c_blk = 256 if c_pad % 256 == 0 else _LANE
    n_cb = c_pad // c_blk

    scale_len = t_rows if t_rows % chunk == 0 else s_work
    n_sb = scale_len // t_rows

    # ---- single padded/tiled copy of x with a 2*pad halo per time tile ----
    xt = jnp.transpose(x, (0, 2, 1))                  # (B, S, C)
    x_ext = jnp.pad(
        xt,
        ((0, 0),
         (pad, (s_work - seq_len) + pad + (t_rows - 2 * pad)),
         (0, c_pad - channels)))                      # (B, s_work + t_rows, c_pad)
    x_main = x_ext[:, :s_work, :].reshape(batch, n_ti, t_rows, c_pad)
    x_halo = x_ext[:, t_rows:t_rows + s_work, :].reshape(
        batch, n_ti, t_rows, c_pad)[:, :, :2 * pad, :]
    x_tiles = jnp.concatenate([x_main, x_halo], axis=2)   # (B, n_ti, T+2*pad, c_pad)

    # ---- stacked parameters: causal taps, chunk taps, causal bias, chunk bias ----
    packed = jnp.concatenate(
        [jnp.transpose(w_causal, (1, 0)).astype(f32),      # (half, C)
         jnp.transpose(w_chunk, (1, 0)).astype(f32),       # (K, C)
         b_causal[None, :].astype(f32),
         b_chunk[None, :].astype(f32)], axis=0)
    packed = jnp.pad(packed, ((0, 0), (0, c_pad - channels)))   # (half+K+2, c_pad)

    # ---- per-row chunk scale and per-row/tap boundary mask, phase-aligned to tiles ----
    cs_t = jnp.pad(jnp.transpose(_get_chunk_scale(scale_p.astype(f32), chunk, ksize),
                                 (1, 0)),
                   ((0, 0), (0, c_pad - channels)))          # (chunk, c_pad)
    pos = jnp.arange(chunk)[:, None] + jnp.arange(ksize)[None, :]
    mask_base = ((pos >= pad) & (pos < chunk + pad)).astype(f32)   # (chunk, K)
    reps = -(-scale_len // chunk)
    scale_arr = jnp.tile(cs_t, (reps, 1))[:scale_len]        # (scale_len, c_pad)
    mask_arr = jnp.tile(mask_base, (reps, 1))[:scale_len]    # (scale_len, K)

    if n_sb == 1:   # tile-invariant: stays VMEM resident across time tiles
        scale_map = lambda b, ci, ti: (0, ci)
        mask_map = lambda b, ci, ti: (0, 0)
    else:           # streamed per time tile (degenerate chunk sizes only)
        scale_map = lambda b, ci, ti: (ti, ci)
        mask_map = lambda b, ci, ti: (ti, 0)

    kernel = functools.partial(_ccdc_kernel, half=half, ksize=ksize)
    out = pl.pallas_call(
        kernel,
        out_shape=jax.ShapeDtypeStruct((batch, s_work, c_pad), x.dtype),
        grid=(batch, n_cb, n_ti),
        in_specs=[
            pl.BlockSpec((1, 1, t_rows + 2 * pad, c_blk),
                         lambda b, ci, ti: (b, ti, 0, ci)),
            pl.BlockSpec((half + ksize + 2, c_blk), lambda b, ci, ti: (0, ci)),
            pl.BlockSpec((t_rows, c_blk), scale_map),
            pl.BlockSpec((t_rows, ksize), mask_map),
        ],
        out_specs=pl.BlockSpec((1, t_rows, c_blk), lambda b, ci, ti: (b, ti, ci)),
        compiler_params=pltpu.CompilerParams(
            dimension_semantics=("parallel", "parallel", "parallel"),
            vmem_limit_bytes=32 * 1024 * 1024),
    )(x_tiles, packed, scale_arr, mask_arr)

    # crop padded tail / padded channels, return (B, C, S) like the torch module
    return jnp.transpose(out[:, :seq_len, :channels], (0, 2, 1))


# -----------------------------------------------------------------------------
# Pure-JAX reference (direct transcription of the torch forward) for validation.
# -----------------------------------------------------------------------------
def reference_forward(x, params, chunk_size=-1):
    w_causal = params["w_causal"]
    b_causal = params["b_causal"]
    w_chunk = params["w_chunk"]
    b_chunk = params["b_chunk"]
    scale_p = params["chunkwise_conv_scale"]
    kernel_size = int(w_chunk.shape[1])
    half = (kernel_size + 1) // 2

    batch, channels, seq_len = x.shape
    left_pad = kernel_size // 2
    if chunk_size < 0 or chunk_size > seq_len:
        chunk_size = seq_len
    right_pad = (-seq_len) % chunk_size
    xp = jnp.pad(x, ((0, 0), (0, 0), (left_pad, right_pad)))

    xc_in = xp[..., : left_pad + seq_len]
    x_causal = jnp.zeros((batch, channels, seq_len), x.dtype)
    for j in range(half):
        x_causal = x_causal + w_causal[:, j][None, :, None] * xc_in[:, :, j:j + seq_len]
    x_causal = x_causal + b_causal[None, :, None]

    x_chunk = xp[..., left_pad:]
    num_chunks = x_chunk.shape[2] // chunk_size
    xr = x_chunk.reshape(batch, channels, num_chunks, chunk_size)
    xr = jnp.pad(xr, ((0, 0), (0, 0), (0, 0), (kernel_size // 2, kernel_size // 2)))
    yc = jnp.zeros((batch, channels, num_chunks, chunk_size), x.dtype)
    for j in range(kernel_size):
        yc = yc + w_chunk[:, j][None, :, None, None] * xr[:, :, :, j:j + chunk_size]
    yc = yc + b_chunk[None, :, None, None]
    cs = _get_chunk_scale(scale_p, chunk_size, kernel_size)      # (C, chunk)
    yc = yc * cs[None, :, None, :]
    yc = yc.reshape(batch, channels, num_chunks * chunk_size)[..., :seq_len]
    return yc + x_causal


# -----------------------------------------------------------------------------
# Demo / self-test
# -----------------------------------------------------------------------------
if __name__ == "__main__":
    batch, channels, seq_len = 2, 8, 16
    kernel_size = 5                      # odd, half_kernel_size = 3
    half_kernel_size = (kernel_size + 1) // 2
    initial_scale = 1.0

    key = jax.random.PRNGKey(0)
    k1, k2, k3, k4, k5, kx = jax.random.split(key, 6)
    params = {
        "w_causal": jax.random.normal(k1, (channels, half_kernel_size), jnp.float32)
        * 0.2 * initial_scale,
        "b_causal": jax.random.uniform(k2, (channels,), jnp.float32,
                                       -0.1 * initial_scale, 0.1 * initial_scale),
        "w_chunk": jax.random.normal(k3, (channels, kernel_size), jnp.float32)
        * 0.2 * initial_scale,
        "b_chunk": jax.random.normal(k4, (channels,), jnp.float32) * 0.05,
        # module __init__ zeros this; randomize to exercise the scale path
        "chunkwise_conv_scale": jax.random.normal(k5, (2, channels, kernel_size),
                                                  jnp.float32) * 0.1,
    }

    x = jax.random.normal(kx, (batch, channels, seq_len), jnp.float32)

    # non-dividing chunk, chunk < kernel_size, and full-sequence chunk
    for chunk_size in (6, 4, -1):
        y = chunk_causal_depthwise_conv1d(x, params, chunk_size=chunk_size)
        y = jax.block_until_ready(y)
        y_ref = reference_forward(x, params, chunk_size=chunk_size)
        assert y.shape == (batch, channels, seq_len)
        assert jnp.allclose(y, y_ref, rtol=1e-5, atol=1e-5), (
            f"mismatch for chunk_size={chunk_size}: "
            f"max abs err {jnp.max(jnp.abs(y - y_ref))}")

    print("KERNEL_OK")
</pallas_src>

<mosaic_0001>
module attributes {stable_mosaic.version = 11 : i64} {
  func.func @_ccdc_kernel(%arg0: i32, %arg1: i32, %arg2: i32, %arg3: memref<1x1x28x128xf32, #tpu.memory_space<vmem>>, %arg4: memref<10x128xf32, #tpu.memory_space<vmem>>, %arg5: memref<24x128xf32, #tpu.memory_space<vmem>>, %arg6: memref<24x5xf32, #tpu.memory_space<vmem>>, %arg7: memref<1x24x128xf32, #tpu.memory_space<vmem>>) attributes {dimension_semantics = [#tpu.dimension_semantics<parallel>, #tpu.dimension_semantics<parallel>, #tpu.dimension_semantics<parallel>], iteration_bounds = array<i64: 2, 1, 1>, scalar_prefetch = 0 : i64, scratch_operands = 0 : i64, tpu.core_type = #tpu.core_type<tc>, window_params = [{transform_indices = @transform_0, window_bounds = array<i64: 1, 1, 28, 128>}, {transform_indices = @transform_1, window_bounds = array<i64: 10, 128>}, {transform_indices = @transform_2, window_bounds = array<i64: 24, 128>}, {pipeline_mode = #tpu.pipeline_mode<synchronous>, transform_indices = @transform_3, window_bounds = array<i64: 24, 5>}, {transform_indices = @transform_4, window_bounds = array<i64: 1, 24, 128>}]} {
    %c0 = arith.constant 0 : index
    %c0_0 = arith.constant 0 : index
    %c0_1 = arith.constant 0 : index
    %c0_2 = arith.constant 0 : index
    %0 = vector.load %arg3[%c0, %c0_0, %c0_1, %c0_2] : memref<1x1x28x128xf32, #tpu.memory_space<vmem>>, vector<1x1x28x128xf32>
    %1 = vector.shape_cast %0 : vector<1x1x28x128xf32> to vector<28x128xf32>
    %c0_3 = arith.constant 0 : index
    %c0_4 = arith.constant 0 : index
    %2 = vector.load %arg4[%c0_3, %c0_4] : memref<10x128xf32, #tpu.memory_space<vmem>>, vector<1x128xf32>
    %3 = vector.extract_strided_slice %1 {offsets = [0, 0], sizes = [24, 128], strides = [1, 1]} : vector<28x128xf32> to vector<24x128xf32>
    %4 = vector.broadcast %2 : vector<1x128xf32> to vector<24x128xf32>
    %5 = arith.mulf %4, %3 : vector<24x128xf32>
    %c1 = arith.constant 1 : index
    %c0_5 = arith.constant 0 : index
    %6 = vector.load %arg4[%c1, %c0_5] : memref<10x128xf32, #tpu.memory_space<vmem>>, vector<1x128xf32>
    %7 = vector.extract_strided_slice %1 {offsets = [1, 0], sizes = [24, 128], strides = [1, 1]} : vector<28x128xf32> to vector<24x128xf32>
    %8 = vector.broadcast %6 : vector<1x128xf32> to vector<24x128xf32>
    %9 = arith.mulf %8, %7 : vector<24x128xf32>
    %10 = arith.addf %5, %9 : vector<24x128xf32>
    %c2 = arith.constant 2 : index
    %c0_6 = arith.constant 0 : index
    %11 = vector.load %arg4[%c2, %c0_6] : memref<10x128xf32, #tpu.memory_space<vmem>>, vector<1x128xf32>
    %12 = vector.extract_strided_slice %1 {offsets = [2, 0], sizes = [24, 128], strides = [1, 1]} : vector<28x128xf32> to vector<24x128xf32>
    %13 = vector.broadcast %11 : vector<1x128xf32> to vector<24x128xf32>
    %14 = arith.mulf %13, %12 : vector<24x128xf32>
    %15 = arith.addf %10, %14 : vector<24x128xf32>
    %c3 = arith.constant 3 : index
    %c0_7 = arith.constant 0 : index
    %16 = vector.load %arg4[%c3, %c0_7] : memref<10x128xf32, #tpu.memory_space<vmem>>, vector<1x128xf32>
    %c0_8 = arith.constant 0 : index
    %c0_9 = arith.constant 0 : index
    %17 = vector.load %arg6[%c0_8, %c0_9] : memref<24x5xf32, #tpu.memory_space<vmem>>, vector<24x1xf32>
    %18 = vector.extract_strided_slice %1 {offsets = [0, 0], sizes = [24, 128], strides = [1, 1]} : vector<28x128xf32> to vector<24x128xf32>
    %19 = vector.broadcast %17 : vector<24x1xf32> to vector<24x128xf32>
    %20 = arith.mulf %19, %18 : vector<24x128xf32>
    %21 = vector.broadcast %16 : vector<1x128xf32> to vector<24x128xf32>
    %22 = arith.mulf %21, %20 : vector<24x128xf32>
    %c4 = arith.constant 4 : index
    %c0_10 = arith.constant 0 : index
    %23 = vector.load %arg4[%c4, %c0_10] : memref<10x128xf32, #tpu.memory_space<vmem>>, vector<1x128xf32>
    %c0_11 = arith.constant 0 : index
    %c1_12 = arith.constant 1 : index
    %24 = vector.load %arg6[%c0_11, %c1_12] : memref<24x5xf32, #tpu.memory_space<vmem>>, vector<24x1xf32>
    %25 = vector.extract_strided_slice %1 {offsets = [1, 0], sizes = [24, 128], strides = [1, 1]} : vector<28x128xf32> to vector<24x128xf32>
    %26 = vector.broadcast %24 : vector<24x1xf32> to vector<24x128xf32>
    %27 = arith.mulf %26, %25 : vector<24x128xf32>
    %28 = vector.broadcast %23 : vector<1x128xf32> to vector<24x128xf32>
    %29 = arith.mulf %28, %27 : vector<24x128xf32>
    %30 = arith.addf %22, %29 : vector<24x128xf32>
    %c5 = arith.constant 5 : index
    %c0_13 = arith.constant 0 : index
    %31 = vector.load %arg4[%c5, %c0_13] : memref<10x128xf32, #tpu.memory_space<vmem>>, vector<1x128xf32>
    %c0_14 = arith.constant 0 : index
    %c2_15 = arith.constant 2 : index
    %32 = vector.load %arg6[%c0_14, %c2_15] : memref<24x5xf32, #tpu.memory_space<vmem>>, vector<24x1xf32>
    %33 = vector.extract_strided_slice %1 {offsets = [2, 0], sizes = [24, 128], strides = [1, 1]} : vector<28x128xf32> to vector<24x128xf32>
    %34 = vector.broadcast %32 : vector<24x1xf32> to vector<24x128xf32>
    %35 = arith.mulf %34, %33 : vector<24x128xf32>
    %36 = vector.broadcast %31 : vector<1x128xf32> to vector<24x128xf32>
    %37 = arith.mulf %36, %35 : vector<24x128xf32>
    %38 = arith.addf %30, %37 : vector<24x128xf32>
    %c6 = arith.constant 6 : index
    %c0_16 = arith.constant 0 : index
    %39 = vector.load %arg4[%c6, %c0_16] : memref<10x128xf32, #tpu.memory_space<vmem>>, vector<1x128xf32>
    %c0_17 = arith.constant 0 : index
    %c3_18 = arith.constant 3 : index
    %40 = vector.load %arg6[%c0_17, %c3_18] : memref<24x5xf32, #tpu.memory_space<vmem>>, vector<24x1xf32>
    %41 = vector.extract_strided_slice %1 {offsets = [3, 0], sizes = [24, 128], strides = [1, 1]} : vector<28x128xf32> to vector<24x128xf32>
    %42 = vector.broadcast %40 : vector<24x1xf32> to vector<24x128xf32>
    %43 = arith.mulf %42, %41 : vector<24x128xf32>
    %44 = vector.broadcast %39 : vector<1x128xf32> to vector<24x128xf32>
    %45 = arith.mulf %44, %43 : vector<24x128xf32>
    %46 = arith.addf %38, %45 : vector<24x128xf32>
    %c7 = arith.constant 7 : index
    %c0_19 = arith.constant 0 : index
    %47 = vector.load %arg4[%c7, %c0_19] : memref<10x128xf32, #tpu.memory_space<vmem>>, vector<1x128xf32>
    %c0_20 = arith.constant 0 : index
    %c4_21 = arith.constant 4 : index
    %48 = vector.load %arg6[%c0_20, %c4_21] : memref<24x5xf32, #tpu.memory_space<vmem>>, vector<24x1xf32>
    %49 = vector.extract_strided_slice %1 {offsets = [4, 0], sizes = [24, 128], strides = [1, 1]} : vector<28x128xf32> to vector<24x128xf32>
    %50 = vector.broadcast %48 : vector<24x1xf32> to vector<24x128xf32>
    %51 = arith.mulf %50, %49 : vector<24x128xf32>
    %52 = vector.broadcast %47 : vector<1x128xf32> to vector<24x128xf32>
    %53 = arith.mulf %52, %51 : vector<24x128xf32>
    %54 = arith.addf %46, %53 : vector<24x128xf32>
    %c8 = arith.constant 8 : index
    %c0_22 = arith.constant 0 : index
    %55 = vector.load %arg4[%c8, %c0_22] : memref<10x128xf32, #tpu.memory_space<vmem>>, vector<1x128xf32>
    %c9 = arith.constant 9 : index
    %c0_23 = arith.constant 0 : index
    %56 = vector.load %arg4[%c9, %c0_23] : memref<10x128xf32, #tpu.memory_space<vmem>>, vector<1x128xf32>
    %57 = vector.broadcast %55 : vector<1x128xf32> to vector<24x128xf32>
    %58 = arith.addf %15, %57 : vector<24x128xf32>
    %59 = vector.broadcast %56 : vector<1x128xf32> to vector<24x128xf32>
    %60 = arith.addf %54, %59 : vector<24x128xf32>
    %c0_24 = arith.constant 0 : index
    %c0_25 = arith.constant 0 : index
    %61 = vector.load %arg5[%c0_24, %c0_25] : memref<24x128xf32, #tpu.memory_space<vmem>>, vector<24x128xf32>
    %62 = arith.mulf %60, %61 : vector<24x128xf32>
    %63 = arith.addf %58, %62 : vector<24x128xf32>
    %c0_26 = arith.constant 0 : index
    %c0_27 = arith.constant 0 : index
    %c0_28 = arith.constant 0 : index
    %64 = vector.load %arg7[%c0_26, %c0_27, %c0_28] : memref<1x24x128xf32, #tpu.memory_space<vmem>>, vector<1x24x128xf32>
    %65 = vector.shape_cast %64 : vector<1x24x128xf32> to vector<24x128xf32>
    %66 = vector.shape_cast %63 : vector<24x128xf32> to vector<1x24x128xf32>
    tpu.vector_store %arg7[%c0_26, %c0_27, %c0_28], %66 {strides = array<i32>} : memref<1x24x128xf32, #tpu.memory_space<vmem>>, vector<1x24x128xf32>,
    return
  }
  func.func @transform_0(%arg0: i32, %arg1: i32, %arg2: i32) -> (i32, i32, i32, i32) {
    %c0_i32 = arith.constant 0 : i32
    %c0_i32_0 = arith.constant 0 : i32
    return %arg0, %arg2, %c0_i32, %arg1 : i32, i32, i32, i32
  }
  func.func @transform_1(%arg0: i32, %arg1: i32, %arg2: i32) -> (i32, i32) {
    %c0_i32 = arith.constant 0 : i32
    %c0_i32_0 = arith.constant 0 : i32
    return %c0_i32, %arg1 : i32, i32
  }
  func.func @transform_2(%arg0: i32, %arg1: i32, %arg2: i32) -> (i32, i32) {
    %c0_i32 = arith.constant 0 : i32
    %c0_i32_0 = arith.constant 0 : i32
    return %c0_i32, %arg1 : i32, i32
  }
  func.func @transform_3(%arg0: i32, %arg1: i32, %arg2: i32) -> (i32, i32) {
    %c0_i32 = arith.constant 0 : i32
    %c0_i32_0 = arith.constant 0 : i32
    %c0_i32_1 = arith.constant 0 : i32
    return %c0_i32, %c0_i32_0 : i32, i32
  }
  func.func @transform_4(%arg0: i32, %arg1: i32, %arg2: i32) -> (i32, i32, i32) {
    %c0_i32 = arith.constant 0 : i32
    return %arg0, %arg2, %arg1 : i32, i32, i32
  }
}

</mosaic_0001>

<llo_original>
// kernel: tpu_custom_call.1
$region0: #{tpu_custom_call.1}
  #allocation0 [shape = 'u32[]', space=smem, size = 0x4, offset = 0x4, fixed_abs, tag = 'smem constant byte address 0x4 - core index']
  #allocation1 [shape = 'u32[72,128]{1,0:T(1,128)}', space=vmem, size = 0x9000, scoped, tag = 'internal scratch']
  %s0 = inlined_call_operand.vmem [shape: f32[2,1,28,128], index: 0, kind: input, shape index: {}]
  %s1 = inlined_call_operand.vmem [shape: f32[10,128], index: 1, kind: input, shape index: {}]
  %s2 = inlined_call_operand.vmem [shape: f32[24,128], index: 2, kind: input, shape index: {}]
  %s3 = inlined_call_operand.vmem [shape: f32[24,5], index: 3, kind: input, shape index: {}]
  %s4 = inlined_call_operand.hbm [shape: f32[2,24,128], index: 4, kind: output, shape index: {}]
  %s5 = sld [smem:[#allocation0]]
  $region49: #{tpu_custom_call.1} parent=0
    _
  %s7 = ssub.s32 1, %s5
  %s8 = scalar_select 0, %s7, %s5
  $region1: #{tpu_custom_call.1} parent=0
    #allocation2 [shape = 'u8[24576]{0}', space=vmem, size = 0x6000, scoped, tag = 'output window, operand 0']
    #allocation3 [shape = 's32[2]{0}', space=sflag, size = 0x8, scoped, tag = 'scoped memory for tpu_custom_call.1']
    %9 = vsyncpa [#allocation3], 0
    %s10 = scalar_lea.sflag [#allocation3], 1
    %11 = vsyncpa %s10, 0
    loop: start=0, step=1, limit=4
    $region2: #{tpu_custom_call.1} parent=1 // loop_pre_header
      _
    $region3: #{tpu_custom_call.1} parent=1 // loop_header
      %s13 = sphi 0, %s17
      %p14 = scmp.ge.s32.totalorder %s13, 4
      %s20 = sphi 0, %s39
      %s21 = sphi 0, %s35
      %s22 = sphi 0, %s31
      %s23 = sphi 0, %s20
      %s24 = sphi 0, %s21
      %s25 = sphi 0, %s22
      %s26 = sphi 0, %s23
      %s27 = sphi 0, %s24
      %s28 = sphi 0, %s25
      %s46 = sphi 0, %s48
      %s49 = sphi 0, %s46
      %s50 = sphi 0, %s49
      %s66 = sphi 0, %s50
      %s72 = sphi 0, %s74
      %s75 = sphi 0, %s72
      %s76 = sphi 0, %s75
      %s92 = sphi 0, %s76
      %s98 = sphi 0, %s100
      %s101 = sphi 0, %s98
      %s102 = sphi 0, %s101
      %s118 = sphi 0, %s102
      %s122 = sphi 0, %s122
      %s124 = sphi 0, %s122
      %s125 = sphi 0, %s124
      %s139 = sphi 0, %s125
      %s149 = sphi 0, %s151
      %s152 = sphi 0, %s149
      %s153 = sphi 0, %s152
      %s169 = sphi 0, %s153
    $region4: #{tpu_custom_call.1} parent=1 // loop_header_branch
      %16 = sbr.rel (%p14) target = $region8
    $region5: #{tpu_custom_call.1} parent=1 // loop_body
      %s18 = ssub.s32 %s13, 1
      %s19 = ssub.s32 %s13, 2
      %s29 = sadd.s32 1, %s22
      %p30 = scmp.ge.s32.totalorder %s29, 1
      %s31 = scalar_select %p30, 0, %s29
      %s32 = sadd.s32 1, %s21
      %s33 = scalar_select %p30, %s32, %s21
      %p34 = scmp.ge.s32.totalorder %s33, 1
      %s35 = scalar_select %p34, 0, %s33
      %s36 = sadd.s32 1, %s20
      %s37 = scalar_select %p34, %s36, %s20
      %p38 = scmp.ge.s32.totalorder %s37, 2
      %s39 = scalar_select %p38, 0, %s37
      %s40 = ssub.s32 %s20, %s39
      %s41 = ssub.s32 %s22, %s31
      %s42 = sor.u32 %s40, %s41
      %s43 = ssub.s32 %s21, %s35
      %s44 = sor.u32 %s42, %s43
      %p45 = scmp.eq.s32.totalorder %s44, 0
      %s47 = sadd.s32 %s46, 1
      %s48 = scalar_select %p45, %s46, %s47
      %p51 = pneg %p45
      %p52 = scmp.eq.s32.totalorder %s13, 1
      %p53 = por %p51, %p52
      %p54 = scmp.ne.s32.totalorder %s46, %s49
      %p55 = scmp.eq.s32.totalorder %s13, 0
      %p56 = por %p54, %p55
      %p57 = scmp.ne.s32.totalorder %s46, %s49
      %p58 = scmp.eq.s32.totalorder %s18, 1
      %p59 = por %p57, %p58
      %p60 = scmp.ne.s32.totalorder %s49, %s50
      %p61 = scmp.eq.s32.totalorder %s18, 0
      %p62 = por %p60, %p61
      %p63 = scmp.ne.s32.totalorder %s49, %s50
      %p64 = scmp.eq.s32.totalorder %s19, 1
      %p65 = por %p63, %p64
      %p67 = scmp.ne.s32.totalorder %s50, %s66
      %p68 = scmp.eq.s32.totalorder %s19, 0
      %p69 = por %p67, %p68
      %s70 = ssub.s32 %s21, %s35
      %p71 = scmp.eq.s32.totalorder %s70, 0
      %s73 = sadd.s32 %s72, 1
      %s74 = scalar_select %p71, %s72, %s73
      %p77 = pneg %p71
      %p78 = scmp.eq.s32.totalorder %s13, 1
      %p79 = por %p77, %p78
      %p80 = scmp.ne.s32.totalorder %s72, %s75
      %p81 = scmp.eq.s32.totalorder %s13, 0
      %p82 = por %p80, %p81
      %p83 = scmp.ne.s32.totalorder %s72, %s75
      %p84 = scmp.eq.s32.totalorder %s18, 1
      %p85 = por %p83, %p84
      %p86 = scmp.ne.s32.totalorder %s75, %s76
      %p87 = scmp.eq.s32.totalorder %s18, 0
      %p88 = por %p86, %p87
      %p89 = scmp.ne.s32.totalorder %s75, %s76
      %p90 = scmp.eq.s32.totalorder %s19, 1
      %p91 = por %p89, %p90
      %p93 = scmp.ne.s32.totalorder %s76, %s92
      %p94 = scmp.eq.s32.totalorder %s19, 0
      %p95 = por %p93, %p94
      %s96 = ssub.s32 %s21, %s35
      %p97 = scmp.eq.s32.totalorder %s96, 0
      %s99 = sadd.s32 %s98, 1
      %s100 = scalar_select %p97, %s98, %s99
      %p103 = pneg %p97
      %p104 = scmp.eq.s32.totalorder %s13, 1
      %p105 = por %p103, %p104
      %p106 = scmp.ne.s32.totalorder %s98, %s101
      %p107 = scmp.eq.s32.totalorder %s13, 0
      %p108 = por %p106, %p107
      %p109 = scmp.ne.s32.totalorder %s98, %s101
      %p110 = scmp.eq.s32.totalorder %s18, 1
      %p111 = por %p109, %p110
      %p112 = scmp.ne.s32.totalorder %s101, %s102
      %p113 = scmp.eq.s32.totalorder %s18, 0
      %p114 = por %p112, %p113
      %p115 = scmp.ne.s32.totalorder %s101, %s102
      %p116 = scmp.eq.s32.totalorder %s19, 1
      %p117 = por %p115, %p116
      %p119 = scmp.ne.s32.totalorder %s102, %s118
      %p120 = scmp.eq.s32.totalorder %s19, 0
      %p121 = por %p119, %p120
      %s123 = sadd.s32 %s122, 1
      %p126 = scmp.eq.s32.totalorder %s13, 1
      %p127 = scmp.ne.s32.totalorder %s122, %s124
      %p128 = scmp.eq.s32.totalorder %s13, 0
      %p129 = por %p127, %p128
      %p130 = scmp.ne.s32.totalorder %s122, %s124
      %p131 = scmp.eq.s32.totalorder %s18, 1
      %p132 = por %p130, %p131
      %p133 = scmp.ne.s32.totalorder %s124, %s125
      %p134 = scmp.eq.s32.totalorder %s18, 0
      %p135 = por %p133, %p134
      %p136 = scmp.ne.s32.totalorder %s124, %s125
      %p137 = scmp.eq.s32.totalorder %s19, 1
      %p138 = por %p136, %p137
      %p140 = scmp.ne.s32.totalorder %s125, %s139
      %p141 = scmp.eq.s32.totalorder %s19, 0
      %p142 = por %p140, %p141
      %s143 = ssub.s32 %s20, %s39
      %s144 = ssub.s32 %s22, %s31
      %s145 = sor.u32 %s143, %s144
      %s146 = ssub.s32 %s21, %s35
      %s147 = sor.u32 %s145, %s146
      %p148 = scmp.eq.s32.totalorder %s147, 0
      %s150 = sadd.s32 %s149, 1
      %s151 = scalar_select %p148, %s149, %s150
      %p154 = pneg %p148
      %p155 = scmp.eq.s32.totalorder %s13, 1
      %p156 = por %p154, %p155
      %p157 = scmp.ne.s32.totalorder %s149, %s152
      %p158 = scmp.eq.s32.totalorder %s13, 0
      %p159 = por %p157, %p158
      %p160 = scmp.ne.s32.totalorder %s149, %s152
      %p161 = scmp.eq.s32.totalorder %s18, 1
      %p162 = por %p160, %p161
      %p163 = scmp.ne.s32.totalorder %s152, %s153
      %p164 = scmp.eq.s32.totalorder %s18, 0
      %p165 = por %p163, %p164
      %p166 = scmp.ne.s32.totalorder %s152, %s153
      %p167 = scmp.eq.s32.totalorder %s19, 1
      %p168 = por %p166, %p167
      %p170 = scmp.ne.s32.totalorder %s153, %s169
      %p171 = scmp.eq.s32.totalorder %s19, 0
      %p172 = por %p170, %p171
      %p173 = scmp.le.s32.totalorder 1, %s13
      %p174 = scmp.lt.s32.totalorder %s13, 3
      %p175 = pnand %p173, %p174
      %p176 = pneg %p175
      // Predicated region
      $region9: #{tpu_custom_call.1} parent=5 // pred_check
        _
      $region10: #{tpu_custom_call.1} parent=5 // pred_check_branch
        %178 = sbr.rel (%p175) target = $region12
      $region11: #{tpu_custom_call.1} parent=5 // pred_region
        %s179 = ssub.s32 %s13, 1
        // Predicated region
        $region13: #{tpu_custom_call.1} parent=11 // pred_check
          %p180 = pneg %p88
        $region14: #{tpu_custom_call.1} parent=11 // pred_check_branch
          %182 = sbr.rel (%p180) target = $region16
        $region15: #{tpu_custom_call.1} parent=11 // pred_region
          %p183 = scmp.lt.s32.totalorder %s24, 0
          %s184 = scalar_select %p183, %s24, 0
          %s185 = smul.addr %s184, 8
          %s186 = scalar_lea.vmem %s1, %s185
        $region16: #{tpu_custom_call.1} parent=11 // pred_fallthru
          _
        // Predicated region
        $region17: #{tpu_custom_call.1} parent=11 // pred_check
          %p187 = pneg %p114
        $region18: #{tpu_custom_call.1} parent=11 // pred_check_branch
          %189 = sbr.rel (%p187) target = $region20
        $region19: #{tpu_custom_call.1} parent=11 // pred_region
          %p190 = scmp.lt.s32.totalorder %s24, 0
          %s191 = scalar_select %p190, %s24, 0
          %s192 = smul.addr %s191, 8
          %s193 = scalar_lea.vmem %s2, %s192
        $region20: #{tpu_custom_call.1} parent=11 // pred_fallthru
          _
        // Predicated region
        $region21: #{tpu_custom_call.1} parent=11 // pred_check
          %p194 = pneg %p135
        $region22: #{tpu_custom_call.1} parent=11 // pred_check_branch
          %196 = sbr.rel (%p194) target = $region24
        $region23: #{tpu_custom_call.1} parent=11 // pred_region
          _
        $region24: #{tpu_custom_call.1} parent=11 // pred_fallthru
          _
      $region12: #{tpu_custom_call.1} parent=5 // pred_fallthru
        _
      %p197 = scmp.lt.s32.totalorder %s13, 2
      // Predicated region
      $region25: #{tpu_custom_call.1} parent=5 // pred_check
        %p198 = pneg %p197
      $region26: #{tpu_custom_call.1} parent=5 // pred_check_branch
        %200 = sbr.rel (%p198) target = $region28
      $region27: #{tpu_custom_call.1} parent=5 // pred_region
        // Predicated region
        $region29: #{tpu_custom_call.1} parent=27 // pred_check
          %p201 = pneg %p56
        $region30: #{tpu_custom_call.1} parent=27 // pred_check_branch
          %203 = sbr.rel (%p201) target = $region32
        $region31: #{tpu_custom_call.1} parent=27 // pred_region
          %p204 = scmp.lt.s32.totalorder %s20, 1
          %s205 = scalar_select %p204, %s20, 1
          %p206 = scmp.lt.s32.totalorder %s22, 0
          %s207 = scalar_select %p206, %s22, 0
          %p208 = scmp.lt.s32.totalorder %s21, 0
          %s209 = scalar_select %p208, %s21, 0
          %s210 = smul.addr %s207, 4
          %s211 = sadd.s32 %s209, %s210
          %s212 = smul.addr %s205, 4
          %s213 = sadd.s32 %s211, %s212
          %s214 = smul.addr %s213, 8
          %s215 = scalar_lea.vmem %s0, %s214
        $region32: #{tpu_custom_call.1} parent=27 // pred_fallthru
          _
      $region28: #{tpu_custom_call.1} parent=5 // pred_fallthru
        _
      %p216 = scmp.le.s32.totalorder 1, %s13
      %p217 = scmp.lt.s32.totalorder %s13, 3
      %p218 = pnand %p216, %p217
      %p219 = pneg %p218
      // Predicated region
      $region33: #{tpu_custom_call.1} parent=5 // pred_check
        _
      $region34: #{tpu_custom_call.1} parent=5 // pred_check_branch
        %221 = sbr.rel (%p218) target = $region36
      $region35: #{tpu_custom_call.1} parent=5 // pred_region
        %s222 = ssub.s32 %s13, 1
        %p223 = scmp.lt.s32.totalorder %s23, 1
        %s224 = scalar_select %p223, %s23, 1
        %p225 = scmp.lt.s32.totalorder %s25, 0
        %s226 = scalar_select %p225, %s25, 0
        %p227 = scmp.lt.s32.totalorder %s24, 0
        %s228 = scalar_select %p227, %s24, 0
        %s229 = smul.addr %s226, 4
        %s230 = sadd.s32 %s228, %s229
        %s231 = smul.addr %s224, 4
        %s232 = sadd.s32 %s230, %s231
        %s233 = smul.addr %s232, 8
        %s234 = scalar_lea.vmem %s0, %s233
        %p235 = pneg %p62
        %p236 = pneg %p59
        %p237 = scmp.lt.s32.totalorder %s24, 0
        %s238 = scalar_select %p237, %s24, 0
        %s239 = smul.addr %s238, 8
        %s240 = scalar_lea.vmem %s1, %s239
        %p241 = pneg %p88
        %p242 = pneg %p85
        %p243 = scmp.lt.s32.totalorder %s24, 0
        %s244 = scalar_select %p243, %s24, 0
        %s245 = smul.addr %s244, 8
        %s246 = scalar_lea.vmem %s2, %s245
        %p247 = pneg %p114
        %p248 = pneg %p111
        %p249 = pneg %p135
        %p250 = pneg %p132
        %p251 = pneg %p165
        %p252 = pneg %p162
        %s253 = sand.u32 %s152, 1
        %s254 = scalar_lea.sflag [#allocation3], %s253
        %s255 = sand.u32 %s152, 1
        %s256 = smul.addr %s255, 24
        %s257 = scalar_lea.vmem [#allocation2], %s256
        %p258 = scmp.lt.s32.totalorder %s23, 1
        %s259 = scalar_select %p258, %s23, 1
        %p260 = scmp.lt.s32.totalorder %s25, 0
        %s261 = scalar_select %p260, %s25, 0
        %p262 = scmp.lt.s32.totalorder %s24, 0
        %s263 = scalar_select %p262, %s24, 0
        %s264 = smul.addr %s261, 4
        %s265 = sadd.s32 %s263, %s264
        %s266 = smul.addr %s259, 4
        %s267 = sadd.s32 %s265, %s266
        %s268 = smul.addr %s267, 8
        %s269 = scalar_lea.vmem %s0, %s268
        %p270 = scmp.lt.s32.totalorder %s24, 0
        %s271 = scalar_select %p270, %s24, 0
        %s272 = smul.addr %s271, 8
        %s273 = scalar_lea.vmem %s1, %s272
        %p274 = scmp.lt.s32.totalorder %s24, 0
        %s275 = scalar_select %p274, %s24, 0
        %s276 = smul.addr %s275, 8
        %s277 = scalar_lea.vmem %s2, %s276
        %s278 = smul.u32 3, %s25
        %v279 = vld [vmem:[%s269] sm:$0xff]
        %v280 = vld [vmem:[%s269 + $0x8] sm:$0xff]
        %v281 = vld [vmem:[%s269 + $0x10] sm:$0xff]
        %v282 = vld [vmem:[%s269 + $0x18] sm:$0xf]
        %v283 = vld [vmem:[%s273] sm:$0x1]
        %v284 = vperm.slane %v283, 0
        %v285 = vmul.f32 %v284, %v279
        %v286 = vmul.f32 %v284, %v280
        %v287 = vmul.f32 %v284, %v281
        %v288 = vld [vmem:[%s273 + $0x1] sm:$0x1]
        %v289 = vperm.slane %v288, 0
        %v290 = vmul.f32 %v289, %v279
        %v291 = vmul.f32 %v289, %v280
        %v292 = vmul.f32 %v289, %v281
        %v293 = vmul.f32 %v289, %v282
        %vm298 = vcmask 1046528
        %v299 = vrot.slane %v290, 1
        %v300 = vrot.slane %v291, 1
        %v301 = vsel %vm298, %v299, %v300
        %v302 = vrot.slane %v292, 1
        %v303 = vsel %vm298, %v300, %v302
        %v304 = vrot.slane %v293, 1
        %v305 = vsel %vm298, %v302, %v304
        %v309 = vadd.f32 %v285, %v301
        %v310 = vadd.f32 %v286, %v303
        %v311 = vadd.f32 %v287, %v305
        %v312 = vld [vmem:[%s273 + $0x2] sm:$0x1]
        %v313 = vperm.slane %v312, 0
        %v314 = vmul.f32 %v313, %v279
        %v315 = vmul.f32 %v313, %v280
        %v316 = vmul.f32 %v313, %v281
        %v317 = vmul.f32 %v313, %v282
        %vm322 = vcmask 1045504
        %v323 = vrot.slane %v314, 2
        %v324 = vrot.slane %v315, 2
        %v325 = vsel %vm322, %v323, %v324
        %v326 = vrot.slane %v316, 2
        %v327 = vsel %vm322, %v324, %v326
        %v328 = vrot.slane %v317, 2
        %v329 = vsel %vm322, %v326, %v328
        %v333 = vadd.f32 %v309, %v325
        %v334 = vadd.f32 %v310, %v327
        %v335 = vadd.f32 %v311, %v329
        %v336 = vld [vmem:[%s273 + $0x3] sm:$0x1]
        %v337 = vld [vmem:[%s3] sm:$0xff]
        %v338 = vld [vmem:[%s3 + $0x8] sm:$0xff]
        %v339 = vld [vmem:[%s3 + $0x10] sm:$0xff]
        %341 = vset.pattern.permute.xlu0 0
        %342 = vperm.xlu0 %341, %v337
        %v343 = vpop.permute.xlu0 %342
        %346 = vset.pattern.permute.xlu0 0
        %347 = vperm.xlu0 %346, %v338
        %v348 = vpop.permute.xlu0 %347
        %351 = vset.pattern.permute.xlu0 0
        %352 = vperm.xlu0 %351, %v339
        %v353 = vpop.permute.xlu0 %352
        %v355 = vmul.f32 %v343, %v279
        %v356 = vmul.f32 %v348, %v280
        %v357 = vmul.f32 %v353, %v281
        %v358 = vperm.slane %v336, 0
        %v359 = vmul.f32 %v358, %v355
        %v360 = vmul.f32 %v358, %v356
        %v361 = vmul.f32 %v358, %v357
        %v362 = vld [vmem:[%s273 + $0x4] sm:$0x1]
        %363 = vset.pattern.permute.xlu0 1
        %364 = vperm.xlu0 %363, %v337
        %v365 = vpop.permute.xlu0 %364
        %367 = vset.pattern.permute.xlu0 1
        %368 = vperm.xlu0 %367, %v338
        %v369 = vpop.permute.xlu0 %368
        %371 = vset.pattern.permute.xlu0 1
        %372 = vperm.xlu0 %371, %v339
        %v373 = vpop.permute.xlu0 %372
        %v379 = vrot.slane %v279, 1
        %v380 = vrot.slane %v280, 1
        %v381 = vsel %vm298, %v379, %v380
        %v382 = vrot.slane %v281, 1
        %v383 = vsel %vm298, %v380, %v382
        %v384 = vrot.slane %v282, 1
        %v385 = vsel %vm298, %v382, %v384
        %v389 = vmul.f32 %v365, %v381
        %v390 = vmul.f32 %v369, %v383
        %v391 = vmul.f32 %v373, %v385
        %v392 = vperm.slane %v362, 0
        %v393 = vmul.f32 %v392, %v389
        %v394 = vmul.f32 %v392, %v390
        %v395 = vmul.f32 %v392, %v391
        %v396 = vadd.f32 %v359, %v393
        %v397 = vadd.f32 %v360, %v394
        %v398 = vadd.f32 %v361, %v395
        %v399 = vld [vmem:[%s273 + $0x5] sm:$0x1]
        %400 = vset.pattern.permute.xlu0 2
        %401 = vperm.xlu0 %400, %v337
        %v402 = vpop.permute.xlu0 %401
        %404 = vset.pattern.permute.xlu0 2
        %405 = vperm.xlu0 %404, %v338
        %v406 = vpop.permute.xlu0 %405
        %408 = vset.pattern.permute.xlu0 2
        %409 = vperm.xlu0 %408, %v339
        %v410 = vpop.permute.xlu0 %409
        %v412 = vrot.slane %v279, 2
        %v413 = vrot.slane %v280, 2
        %v414 = vsel %vm322, %v412, %v413
        %v415 = vrot.slane %v281, 2
        %v416 = vsel %vm322, %v413, %v415
        %v417 = vrot.slane %v282, 2
        %v418 = vsel %vm322, %v415, %v417
        %v422 = vmul.f32 %v402, %v414
        %v423 = vmul.f32 %v406, %v416
        %v424 = vmul.f32 %v410, %v418
        %v425 = vperm.slane %v399, 0
        %v426 = vmul.f32 %v425, %v422
        %v427 = vmul.f32 %v425, %v423
        %v428 = vmul.f32 %v425, %v424
        %v429 = vadd.f32 %v396, %v426
        %v430 = vadd.f32 %v397, %v427
        %v431 = vadd.f32 %v398, %v428
        %v432 = vld [vmem:[%s273 + $0x6] sm:$0x1]
        %433 = vset.pattern.permute.xlu0 3
        %434 = vperm.xlu0 %433, %v337
        %v435 = vpop.permute.xlu0 %434
        %437 = vset.pattern.permute.xlu0 3
        %438 = vperm.xlu0 %437, %v338
        %v439 = vpop.permute.xlu0 %438
        %441 = vset.pattern.permute.xlu0 3
        %442 = vperm.xlu0 %441, %v339
        %v443 = vpop.permute.xlu0 %442
        %vm445 = vcmask 1044480
        %v446 = vrot.slane %v279, 3
        %v447 = vrot.slane %v280, 3
        %v448 = vsel %vm445, %v446, %v447
        %v449 = vrot.slane %v281, 3
        %v450 = vsel %vm445, %v447, %v449
        %v451 = vrot.slane %v282, 3
        %v452 = vsel %vm445, %v449, %v451
        %v456 = vmul.f32 %v435, %v448
        %v457 = vmul.f32 %v439, %v450
        %v458 = vmul.f32 %v443, %v452
        %v459 = vperm.slane %v432, 0
        %v460 = vmul.f32 %v459, %v456
        %v461 = vmul.f32 %v459, %v457
        %v462 = vmul.f32 %v459, %v458
        %v463 = vadd.f32 %v429, %v460
        %v464 = vadd.f32 %v430, %v461
        %v465 = vadd.f32 %v431, %v462
        %v466 = vld [vmem:[%s273 + $0x7] sm:$0x1]
        %467 = vset.pattern.permute.xlu0 4
        %468 = vperm.xlu0 %467, %v337
        %v469 = vpop.permute.xlu0 %468
        %471 = vset.pattern.permute.xlu0 4
        %472 = vperm.xlu0 %471, %v338
        %v473 = vpop.permute.xlu0 %472
        %475 = vset.pattern.permute.xlu0 4
        %476 = vperm.xlu0 %475, %v339
        %v477 = vpop.permute.xlu0 %476
        %vm479 = vcmask 1043456
        %v480 = vrot.slane %v279, 4
        %v481 = vrot.slane %v280, 4
        %v482 = vsel %vm479, %v480, %v481
        %v483 = vrot.slane %v281, 4
        %v484 = vsel %vm479, %v481, %v483
        %v485 = vrot.slane %v282, 4
        %v486 = vsel %vm479, %v483, %v485
        %v490 = vmul.f32 %v469, %v482
        %v491 = vmul.f32 %v473, %v484
        %v492 = vmul.f32 %v477, %v486
        %v493 = vperm.slane %v466, 0
        %v494 = vmul.f32 %v493, %v490
        %v495 = vmul.f32 %v493, %v491
        %v496 = vmul.f32 %v493, %v492
        %v497 = vadd.f32 %v463, %v494
        %v498 = vadd.f32 %v464, %v495
        %v499 = vadd.f32 %v465, %v496
        %v500 = vld [vmem:[%s273 + $0x8] sm:$0x1]
        %v501 = vld [vmem:[%s273 + $0x9] sm:$0x1]
        %v502 = vperm.slane %v500, 0
        %v503 = vadd.f32 %v333, %v502
        %v504 = vadd.f32 %v334, %v502
        %v505 = vadd.f32 %v335, %v502
        %v506 = vperm.slane %v501, 0
        %v507 = vadd.f32 %v497, %v506
        %v508 = vadd.f32 %v498, %v506
        %v509 = vadd.f32 %v499, %v506
        %v510 = vld [vmem:[%s277] sm:$0xff]
        %v511 = vld [vmem:[%s277 + $0x8] sm:$0xff]
        %v512 = vld [vmem:[%s277 + $0x10] sm:$0xff]
        %v513 = vmul.f32 %v507, %v510
        %v514 = vmul.f32 %v508, %v511
        %v515 = vmul.f32 %v509, %v512
        %v516 = vadd.f32 %v503, %v513
        %v517 = vadd.f32 %v504, %v514
        %v518 = vadd.f32 %v505, %v515
        %519 = vst [vmem:[%s257] sm:$0xff] %v516
        %520 = vst [vmem:[%s257 + $0x8] sm:$0xff] %v517
        %521 = vst [vmem:[%s257 + $0x10] sm:$0xff] %v518
        %s522 = sand.u32 %s152, 1
        %s523 = scalar_lea.sflag [#allocation3], %s522
        %s524 = sand.u32 %s152, 1
        %s525 = smul.addr %s524, 24
        %s526 = scalar_lea.vmem [#allocation2], %s525
        // Predicated region
        $region37: #{tpu_custom_call.1} parent=35 // pred_check
          %p527 = pneg %p162
        $region38: #{tpu_custom_call.1} parent=35 // pred_check_branch
          %529 = sbr.rel (%p527) target = $region40
        $region39: #{tpu_custom_call.1} parent=35 // pred_region
          %s530 = smul.u32 3, %s25
          %532 = vsyncadd %s523, 0
          %s533 = sadd.s32 %s24, %s530
          %s534 = smul.addr %s23, 3
          %s535 = sadd.s32 %s533, %s534
          %s536 = smul.addr %s535, 8
          %s537 = scalar_lea.hbm %s4, %s536
          %s538 = sshll.u32 %s526, 4
          %s539 = int_to_ptr.vmem [resolvable:$true] %s538
          %s540 = sshll.u32 %s537, 4
          %s541 = int_to_ptr.hbm [resolvable:$true] %s540
          %546 = dma.vmem_to_hbm [thread:$0]  %s539, 384, %s541, %s523, 128, 128, 8
        $region40: #{tpu_custom_call.1} parent=35 // pred_fallthru
          _
      $region36: #{tpu_custom_call.1} parent=5 // pred_fallthru
        _
      %p547 = scmp.le.s32.totalorder 2, %s13
      // Predicated region
      $region41: #{tpu_custom_call.1} parent=5 // pred_check
        %p548 = pneg %p547
      $region42: #{tpu_custom_call.1} parent=5 // pred_check_branch
        %550 = sbr.rel (%p548) target = $region44
      $region43: #{tpu_custom_call.1} parent=5 // pred_region
        %s551 = ssub.s32 %s13, 2
        // Predicated region
        $region45: #{tpu_custom_call.1} parent=43 // pred_check
          %p552 = pneg %p168
        $region46: #{tpu_custom_call.1} parent=43 // pred_check_branch
          %554 = sbr.rel (%p552) target = $region48
        $region47: #{tpu_custom_call.1} parent=43 // pred_region
          %s555 = sand.u32 %s153, 1
          %s556 = scalar_lea.sflag [#allocation3], %s555
          %s557 = sand.u32 %s153, 1
          %s558 = smul.addr %s557, 24
          %s559 = scalar_lea.vmem [#allocation2], %s558
          %561 = dma.done %s556, 384
        $region48: #{tpu_custom_call.1} parent=43 // pred_fallthru
          _
      $region44: #{tpu_custom_call.1} parent=5 // pred_fallthru
        _
    $region6: #{tpu_custom_call.1} parent=1 // loop_footer
      %s17 = sadd.s32 1, %s13
    $region7: #{tpu_custom_call.1} parent=1 // loop_footer_branch
      %12 = sbr.rel target = $region3
    $region8: #{tpu_custom_call.1} parent=1 // loop_exit
      _
    %562 = vsyncpa [#allocation3], 1
    %s563 = scalar_lea.sflag [#allocation3], 1
    %564 = vsyncpa %s563, 1

</llo_original>
